<compile_context>
chip_gen: v5e
topology: v5e:2x2
jax: 0.10.0
libtpu: 0.0.40
codegen_flags: <defaults>
</compile_context>

<pallas_src>
import functools

import jax
import jax.numpy as jnp
from jax import lax
from jax.experimental import pallas as pl
from jax.experimental.pallas import tpu as pltpu


def _round_up(x, m):
    return ((x + m - 1) // m) * m


def _irbf_kernel(b_i_ref, ng2_i_ref, ct_i_ref, rb_j_ref, g2_j_ref, ct_j_ref,
                 out_ref, acc_ref, *, n, p, kc, lanes, block_i, block_j,
                 needs_mask, unroll):
    i = pl.program_id(0)
    j = pl.program_id(1)

    # Wide resident accumulator (block_j, lanes): zeroed at the first j step.
    @pl.when(j == 0)
    def _zero():
        acc_ref[...] = jnp.zeros_like(acc_ref)

    def sweep(masked):
        if masked:
            # Hoisted out of the row loop: validity of every (row, lane) slot on the
            # packed j side.  lane -> j particle = (j*block_j + row)*p + lane//kc.
            jj = j * block_j + lax.broadcasted_iota(jnp.int32, (block_j, lanes), 0)
            if p > 1:
                slot = lax.broadcasted_iota(jnp.int32, (block_j, lanes), 1) // kc
                jj = jj * p + slot
            j_valid = jj < n
        i_base = i * block_i

        def chunk(c, carry):
            base = pl.multiple_of(c * 8, 8)
            b8 = b_i_ref[pl.ds(base, 8), :]        # (8, lanes) aligned chunk loads
            ng8 = ng2_i_ref[pl.ds(base, 8), :]
            ct8 = ct_i_ref[pl.ds(base, 8), :]
            for rr in range(8):                    # static unroll: 8 i-rows per chunk
                b_r = b8[rr:rr + 1, :]             # (1, lanes) -> sublane broadcast
                ng_r = ng8[rr:rr + 1, :]
                ct_r = ct8[rr:rr + 1, :]
                diff = rb_j_ref[...] - b_r                          # (BJ, lanes)
                arg = (diff * diff) * (ng_r * g2_j_ref[...])
                val = (ct_r + ct_j_ref[...]) * jnp.exp(arg)
                if masked:
                    ok = j_valid & (i_base + base + rr < n)
                    val = jnp.where(ok, val, 0.0)
                acc_ref[...] += val
            return carry

        lax.fori_loop(0, block_i // 8, chunk, None, unroll=unroll)

    if needs_mask:
        # Only tiles that straddle the n boundary pay for the mask.
        straddles = ((i + 1) * block_i > n) | ((j + 1) * block_j * p > n)

        @pl.when(jnp.logical_not(straddles))
        def _interior():
            sweep(masked=False)

        @pl.when(straddles)
        def _boundary():
            sweep(masked=True)
    else:
        sweep(masked=False)

    # One deferred cross-sublane reduction per i block (lane-dense (8, lanes) row).
    @pl.when(j == pl.num_programs(1) - 1)
    def _flush():
        red = acc_ref[0:8, :]
        for s in range(1, block_j // 8):
            red = red + acc_ref[8 * s:8 * (s + 1), :]
        out_ref[...] = red


@jax.jit
def inductive_radial_biasing_force(x, t, offset, gamma, coefficient):
    """Pallas implementation of InductiveRadialBiasingForce.forward(x, t)."""
    n, num_offsets, num_orders = offset.shape
    k = num_offsets * num_orders
    f32 = jnp.float32

    off = offset.reshape(n, k).astype(f32)
    gam = gamma.reshape(n, k).astype(f32)
    coef = coefficient.reshape(n, k).astype(f32)
    xf = x.astype(f32)

    # Fold the time vector into the coefficient: (c_i+c_j)*E*t == (c_i*t + c_j*t)*E.
    orders = jnp.arange(num_orders, dtype=f32)
    tvec = jnp.sin(2.0 * jnp.pi * t * orders)                 # (num_orders,)
    ct = coef * jnp.tile(tvec, (num_offsets,))[None, :]       # (n, k)

    # Hoist per-particle math out of the pairwise kernel.
    rnorm = jnp.sqrt(jnp.sum(xf * xf, axis=-1, keepdims=True))    # (n, 1)
    rb = rnorm - off            # j-side: rnorm_j - offset_j
    g2 = gam * gam              # j-side
    ng2 = -g2                   # i-side (folds the exp negation)

    # Lane packing: p j-particles per 128-lane row (kc lanes each); i-side K-vectors
    # are tiled p times along lanes so the element-wise math lines up.
    if k <= 128:
        kc = pl.next_power_of_2(max(k, 1))
        p = 128 // kc
        lanes = 128
    else:
        kc = _round_up(k, 128)
        p = 1
        lanes = kc

    # Particle blocking: block_i large (cuts j-side HBM re-streaming); keep gi >= 2
    # whenever possible so the "parallel" i axis feeds both v7x TensorCores.
    row_budget = max(8, ((512 * 128) // lanes) // 8 * 8)
    n8 = _round_up(n, 8)
    if n8 >= 16:
        gi = max(2, pl.cdiv(n8, row_budget))
        block_i = _round_up(pl.cdiv(n, gi), 8)
    else:
        gi, block_i = 1, n8
    ni = gi * block_i

    jrows = max(1, pl.cdiv(n, p))                 # packed j rows needed
    bj_budget = max(8, min(row_budget, 256))
    gj = max(1, pl.cdiv(_round_up(jrows, 8), bj_budget))
    block_j = _round_up(pl.cdiv(jrows, gj), 8)
    nj_rows = gj * block_j
    nj_particles = nj_rows * p

    needs_mask = (ni > n) or (nj_particles > n)

    def pad_i(a):   # (n, k) -> (ni, lanes): zero-pad, tile p times along lanes
        ap = jnp.zeros((ni, kc), f32).at[:n, :k].set(a)
        return jnp.tile(ap, (1, p)) if p > 1 else ap

    def pad_j(a):   # (n, k) -> (nj_rows, lanes): p packed particles per row
        ap = jnp.zeros((nj_particles, kc), f32).at[:n, :k].set(a)
        return ap.reshape(nj_rows, p * kc)

    b_i, ng2_i, ct_i = pad_i(off), pad_i(ng2), pad_i(ct)
    rb_j, g2_j, ct_j = pad_j(rb), pad_j(g2), pad_j(ct)

    trips = block_i // 8
    unroll = 2 if (trips >= 2 and trips % 2 == 0) else 1

    kernel = functools.partial(
        _irbf_kernel, n=n, p=p, kc=kc, lanes=lanes,
        block_i=block_i, block_j=block_j, needs_mask=needs_mask, unroll=unroll)

    cost = pl.CostEstimate(
        flops=6 * ni * nj_rows * lanes,
        transcendentals=ni * nj_rows * lanes,
        # j-side tiles are re-streamed once per i block; i-side read once per i block.
        bytes_accessed=(3 * ni * lanes + 3 * gi * nj_rows * lanes + gi * 8 * lanes) * 4)

    i_spec = pl.BlockSpec((block_i, lanes), lambda i, j: (i, 0))
    j_spec = pl.BlockSpec((block_j, lanes), lambda i, j: (j, 0))

    partial_rows = pl.pallas_call(
        kernel,
        out_shape=jax.ShapeDtypeStruct((gi * 8, lanes), f32),
        grid=(gi, gj),
        in_specs=[i_spec, i_spec, i_spec,      # offset, -gamma^2, coeff*t   (i side)
                  j_spec, j_spec, j_spec],     # rnorm-offset, gamma^2, coeff*t (j side)
        out_specs=pl.BlockSpec((8, lanes), lambda i, j: (i, 0)),
        scratch_shapes=[pltpu.VMEM((block_j, lanes), f32)],
        compiler_params=pltpu.CompilerParams(
            dimension_semantics=("parallel", "arbitrary"),
            vmem_limit_bytes=32 * 1024 * 1024),
        cost_estimate=cost,
    )(b_i, ng2_i, ct_i, rb_j, g2_j, ct_j)

    # Tiny host-side reduction of the per-i-block lane-dense partial rows.
    return jnp.sum(partial_rows)


def _reference_forward(x, t, offset, gamma, coefficient):
    """Pure-JAX port of the torch forward for verification."""
    num_orders = offset.shape[-1]
    tvec = jnp.sin(2.0 * jnp.pi * t * jnp.arange(num_orders, dtype=jnp.float32))
    r = jnp.linalg.norm(x, axis=-1, keepdims=True)[..., None]          # (n, 1, 1)
    off = offset[None, :, :, :] + offset[:, None, :, :]                # (n, n, O, R)
    diff = r - off                                                     # r broadcasts as r[j]
    gam = gamma[None, :, :, :] * gamma[:, None, :, :]
    val = jnp.exp(-(diff ** 2) * (gam ** 2)) * tvec
    coef = coefficient[None, :, :, :] + coefficient[:, None, :, :]
    return jnp.sum(coef * val)


if __name__ == "__main__":
    num_offsets, num_orders, d = 8, 8, 3
    max_distance, gamma0 = 10.0, 1.0
    t = 0.37

    key = jax.random.PRNGKey(0)
    # n=16 exercises the fully packed, unpadded path; n=13 exercises the
    # boundary-tile masking path (padded i rows and padded j lane slots).
    for n in (16, 13):
        key, k1, k2, k3, k4 = jax.random.split(key, 5)
        offset = jax.random.uniform(
            k1, (n, num_offsets, num_orders), minval=0.0, maxval=max_distance
        ).astype(jnp.float32)
        gamma = (gamma0 * (1.0 + jax.random.normal(k2, (n, num_offsets, num_orders)))
                 ).astype(jnp.float32)
        coefficient = jax.random.normal(
            k3, (n, num_offsets, num_orders)).astype(jnp.float32)
        x = jax.random.normal(k4, (n, d), dtype=jnp.float32)

        out = jax.block_until_ready(
            inductive_radial_biasing_force(x, t, offset, gamma, coefficient))
        ref = _reference_forward(x, t, offset, gamma, coefficient)
        if not jnp.allclose(out, ref, rtol=1e-3, atol=5e-3):
            raise AssertionError(f"n={n}: mismatch pallas={out} ref={ref}")

    print("KERNEL_OK")
</pallas_src>

<mosaic_0001>
module attributes {stable_mosaic.version = 11 : i64} {
  func.func @_irbf_kernel(%arg0: i32, %arg1: i32, %arg2: memref<8x128xf32, #tpu.memory_space<vmem>>, %arg3: memref<8x128xf32, #tpu.memory_space<vmem>>, %arg4: memref<8x128xf32, #tpu.memory_space<vmem>>, %arg5: memref<8x128xf32, #tpu.memory_space<vmem>>, %arg6: memref<8x128xf32, #tpu.memory_space<vmem>>, %arg7: memref<8x128xf32, #tpu.memory_space<vmem>>, %arg8: memref<8x128xf32, #tpu.memory_space<vmem>>, %arg9: memref<8x128xf32, #tpu.memory_space<vmem>>) attributes {dimension_semantics = [#tpu.dimension_semantics<parallel>, #tpu.dimension_semantics<arbitrary>], iteration_bounds = array<i64: 2, 1>, scalar_prefetch = 0 : i64, scratch_operands = 1 : i64, tpu.core_type = #tpu.core_type<tc>, window_params = [{transform_indices = @transform_0, window_bounds = array<i64: 8, 128>}, {transform_indices = @transform_1, window_bounds = array<i64: 8, 128>}, {transform_indices = @transform_2, window_bounds = array<i64: 8, 128>}, {transform_indices = @transform_3, window_bounds = array<i64: 8, 128>}, {transform_indices = @transform_4, window_bounds = array<i64: 8, 128>}, {transform_indices = @transform_5, window_bounds = array<i64: 8, 128>}, {transform_indices = @transform_6, window_bounds = array<i64: 8, 128>}]} {
    %c0_i32 = arith.constant 0 : i32
    %0 = arith.cmpi eq, %arg1, %c0_i32 : i32
    %1 = arith.extui %0 : i1 to i32
    %c0_i32_0 = arith.constant 0 : i32
    %2 = arith.cmpi ne, %1, %c0_i32_0 : i32
    scf.if %2 {
      %cst = arith.constant 0.000000e+00 : f32
      %166 = vector.broadcast %cst : f32 to vector<8x128xf32>
      %c0_86 = arith.constant 0 : index
      %c0_87 = arith.constant 0 : index
      %167 = vector.load %arg9[%c0_86, %c0_87] : memref<8x128xf32, #tpu.memory_space<vmem>>, vector<8x128xf32>
      tpu.vector_store %arg9[%c0_86, %c0_87], %166 {strides = array<i32>} : memref<8x128xf32, #tpu.memory_space<vmem>>, vector<8x128xf32>,
    } else {
    }
    %c0_i32_1 = arith.constant 0 : i32
    %c8_i32 = arith.constant 8 : i32
    %3 = arith.muli %c0_i32_1, %c8_i32 : i32
    %4 = tpu.assume_multiple %3, 8 : i32
    %5 = arith.index_cast %4 : i32 to index
    %c0 = arith.constant 0 : index
    %6 = vector.load %arg2[%5, %c0] : memref<8x128xf32, #tpu.memory_space<vmem>>, vector<8x128xf32>
    %7 = arith.index_cast %4 : i32 to index
    %c0_2 = arith.constant 0 : index
    %8 = vector.load %arg3[%7, %c0_2] : memref<8x128xf32, #tpu.memory_space<vmem>>, vector<8x128xf32>
    %9 = arith.index_cast %4 : i32 to index
    %c0_3 = arith.constant 0 : index
    %10 = vector.load %arg4[%9, %c0_3] : memref<8x128xf32, #tpu.memory_space<vmem>>, vector<8x128xf32>
    %11 = vector.extract_strided_slice %6 {offsets = [0, 0], sizes = [1, 128], strides = [1, 1]} : vector<8x128xf32> to vector<1x128xf32>
    %12 = vector.extract_strided_slice %8 {offsets = [0, 0], sizes = [1, 128], strides = [1, 1]} : vector<8x128xf32> to vector<1x128xf32>
    %13 = vector.extract_strided_slice %10 {offsets = [0, 0], sizes = [1, 128], strides = [1, 1]} : vector<8x128xf32> to vector<1x128xf32>
    %c0_4 = arith.constant 0 : index
    %c0_5 = arith.constant 0 : index
    %14 = vector.load %arg5[%c0_4, %c0_5] : memref<8x128xf32, #tpu.memory_space<vmem>>, vector<8x128xf32>
    %15 = vector.broadcast %11 : vector<1x128xf32> to vector<8x128xf32>
    %16 = arith.subf %14, %15 : vector<8x128xf32>
    %17 = arith.mulf %16, %16 : vector<8x128xf32>
    %c0_6 = arith.constant 0 : index
    %c0_7 = arith.constant 0 : index
    %18 = vector.load %arg6[%c0_6, %c0_7] : memref<8x128xf32, #tpu.memory_space<vmem>>, vector<8x128xf32>
    %19 = vector.broadcast %12 : vector<1x128xf32> to vector<8x128xf32>
    %20 = arith.mulf %19, %18 : vector<8x128xf32>
    %21 = arith.mulf %17, %20 : vector<8x128xf32>
    %c0_8 = arith.constant 0 : index
    %c0_9 = arith.constant 0 : index
    %22 = vector.load %arg7[%c0_8, %c0_9] : memref<8x128xf32, #tpu.memory_space<vmem>>, vector<8x128xf32>
    %23 = vector.broadcast %13 : vector<1x128xf32> to vector<8x128xf32>
    %24 = arith.addf %23, %22 : vector<8x128xf32>
    %25 = math.exp %21 : vector<8x128xf32>
    %26 = arith.mulf %24, %25 : vector<8x128xf32>
    %c0_10 = arith.constant 0 : index
    %c0_11 = arith.constant 0 : index
    %27 = vector.load %arg9[%c0_10, %c0_11] : memref<8x128xf32, #tpu.memory_space<vmem>>, vector<8x128xf32>
    %28 = arith.addf %27, %26 : vector<8x128xf32>
    %c0_12 = arith.constant 0 : index
    %c0_13 = arith.constant 0 : index
    %29 = vector.load %arg9[%c0_12, %c0_13] : memref<8x128xf32, #tpu.memory_space<vmem>>, vector<8x128xf32>
    tpu.vector_store %arg9[%c0_12, %c0_13], %28 {strides = array<i32>} : memref<8x128xf32, #tpu.memory_space<vmem>>, vector<8x128xf32>,
    %30 = vector.extract_strided_slice %6 {offsets = [1, 0], sizes = [1, 128], strides = [1, 1]} : vector<8x128xf32> to vector<1x128xf32>
    %31 = vector.extract_strided_slice %8 {offsets = [1, 0], sizes = [1, 128], strides = [1, 1]} : vector<8x128xf32> to vector<1x128xf32>
    %32 = vector.extract_strided_slice %10 {offsets = [1, 0], sizes = [1, 128], strides = [1, 1]} : vector<8x128xf32> to vector<1x128xf32>
    %c0_14 = arith.constant 0 : index
    %c0_15 = arith.constant 0 : index
    %33 = vector.load %arg5[%c0_14, %c0_15] : memref<8x128xf32, #tpu.memory_space<vmem>>, vector<8x128xf32>
    %34 = vector.broadcast %30 : vector<1x128xf32> to vector<8x128xf32>
    %35 = arith.subf %33, %34 : vector<8x128xf32>
    %36 = arith.mulf %35, %35 : vector<8x128xf32>
    %c0_16 = arith.constant 0 : index
    %c0_17 = arith.constant 0 : index
    %37 = vector.load %arg6[%c0_16, %c0_17] : memref<8x128xf32, #tpu.memory_space<vmem>>, vector<8x128xf32>
    %38 = vector.broadcast %31 : vector<1x128xf32> to vector<8x128xf32>
    %39 = arith.mulf %38, %37 : vector<8x128xf32>
    %40 = arith.mulf %36, %39 : vector<8x128xf32>
    %c0_18 = arith.constant 0 : index
    %c0_19 = arith.constant 0 : index
    %41 = vector.load %arg7[%c0_18, %c0_19] : memref<8x128xf32, #tpu.memory_space<vmem>>, vector<8x128xf32>
    %42 = vector.broadcast %32 : vector<1x128xf32> to vector<8x128xf32>
    %43 = arith.addf %42, %41 : vector<8x128xf32>
    %44 = math.exp %40 : vector<8x128xf32>
    %45 = arith.mulf %43, %44 : vector<8x128xf32>
    %c0_20 = arith.constant 0 : index
    %c0_21 = arith.constant 0 : index
    %46 = vector.load %arg9[%c0_20, %c0_21] : memref<8x128xf32, #tpu.memory_space<vmem>>, vector<8x128xf32>
    %47 = arith.addf %46, %45 : vector<8x128xf32>
    %c0_22 = arith.constant 0 : index
    %c0_23 = arith.constant 0 : index
    %48 = vector.load %arg9[%c0_22, %c0_23] : memref<8x128xf32, #tpu.memory_space<vmem>>, vector<8x128xf32>
    tpu.vector_store %arg9[%c0_22, %c0_23], %47 {strides = array<i32>} : memref<8x128xf32, #tpu.memory_space<vmem>>, vector<8x128xf32>,
    %49 = vector.extract_strided_slice %6 {offsets = [2, 0], sizes = [1, 128], strides = [1, 1]} : vector<8x128xf32> to vector<1x128xf32>
    %50 = vector.extract_strided_slice %8 {offsets = [2, 0], sizes = [1, 128], strides = [1, 1]} : vector<8x128xf32> to vector<1x128xf32>
    %51 = vector.extract_strided_slice %10 {offsets = [2, 0], sizes = [1, 128], strides = [1, 1]} : vector<8x128xf32> to vector<1x128xf32>
    %c0_24 = arith.constant 0 : index
    %c0_25 = arith.constant 0 : index
    %52 = vector.load %arg5[%c0_24, %c0_25] : memref<8x128xf32, #tpu.memory_space<vmem>>, vector<8x128xf32>
    %53 = vector.broadcast %49 : vector<1x128xf32> to vector<8x128xf32>
    %54 = arith.subf %52, %53 : vector<8x128xf32>
    %55 = arith.mulf %54, %54 : vector<8x128xf32>
    %c0_26 = arith.constant 0 : index
    %c0_27 = arith.constant 0 : index
    %56 = vector.load %arg6[%c0_26, %c0_27] : memref<8x128xf32, #tpu.memory_space<vmem>>, vector<8x128xf32>
    %57 = vector.broadcast %50 : vector<1x128xf32> to vector<8x128xf32>
    %58 = arith.mulf %57, %56 : vector<8x128xf32>
    %59 = arith.mulf %55, %58 : vector<8x128xf32>
    %c0_28 = arith.constant 0 : index
    %c0_29 = arith.constant 0 : index
    %60 = vector.load %arg7[%c0_28, %c0_29] : memref<8x128xf32, #tpu.memory_space<vmem>>, vector<8x128xf32>
    %61 = vector.broadcast %51 : vector<1x128xf32> to vector<8x128xf32>
    %62 = arith.addf %61, %60 : vector<8x128xf32>
    %63 = math.exp %59 : vector<8x128xf32>
    %64 = arith.mulf %62, %63 : vector<8x128xf32>
    %c0_30 = arith.constant 0 : index
    %c0_31 = arith.constant 0 : index
    %65 = vector.load %arg9[%c0_30, %c0_31] : memref<8x128xf32, #tpu.memory_space<vmem>>, vector<8x128xf32>
    %66 = arith.addf %65, %64 : vector<8x128xf32>
    %c0_32 = arith.constant 0 : index
    %c0_33 = arith.constant 0 : index
    %67 = vector.load %arg9[%c0_32, %c0_33] : memref<8x128xf32, #tpu.memory_space<vmem>>, vector<8x128xf32>
    tpu.vector_store %arg9[%c0_32, %c0_33], %66 {strides = array<i32>} : memref<8x128xf32, #tpu.memory_space<vmem>>, vector<8x128xf32>,
    %68 = vector.extract_strided_slice %6 {offsets = [3, 0], sizes = [1, 128], strides = [1, 1]} : vector<8x128xf32> to vector<1x128xf32>
    %69 = vector.extract_strided_slice %8 {offsets = [3, 0], sizes = [1, 128], strides = [1, 1]} : vector<8x128xf32> to vector<1x128xf32>
    %70 = vector.extract_strided_slice %10 {offsets = [3, 0], sizes = [1, 128], strides = [1, 1]} : vector<8x128xf32> to vector<1x128xf32>
    %c0_34 = arith.constant 0 : index
    %c0_35 = arith.constant 0 : index
    %71 = vector.load %arg5[%c0_34, %c0_35] : memref<8x128xf32, #tpu.memory_space<vmem>>, vector<8x128xf32>
    %72 = vector.broadcast %68 : vector<1x128xf32> to vector<8x128xf32>
    %73 = arith.subf %71, %72 : vector<8x128xf32>
    %74 = arith.mulf %73, %73 : vector<8x128xf32>
    %c0_36 = arith.constant 0 : index
    %c0_37 = arith.constant 0 : index
    %75 = vector.load %arg6[%c0_36, %c0_37] : memref<8x128xf32, #tpu.memory_space<vmem>>, vector<8x128xf32>
    %76 = vector.broadcast %69 : vector<1x128xf32> to vector<8x128xf32>
    %77 = arith.mulf %76, %75 : vector<8x128xf32>
    %78 = arith.mulf %74, %77 : vector<8x128xf32>
    %c0_38 = arith.constant 0 : index
    %c0_39 = arith.constant 0 : index
    %79 = vector.load %arg7[%c0_38, %c0_39] : memref<8x128xf32, #tpu.memory_space<vmem>>, vector<8x128xf32>
    %80 = vector.broadcast %70 : vector<1x128xf32> to vector<8x128xf32>
    %81 = arith.addf %80, %79 : vector<8x128xf32>
    %82 = math.exp %78 : vector<8x128xf32>
    %83 = arith.mulf %81, %82 : vector<8x128xf32>
    %c0_40 = arith.constant 0 : index
    %c0_41 = arith.constant 0 : index
    %84 = vector.load %arg9[%c0_40, %c0_41] : memref<8x128xf32, #tpu.memory_space<vmem>>, vector<8x128xf32>
    %85 = arith.addf %84, %83 : vector<8x128xf32>
    %c0_42 = arith.constant 0 : index
    %c0_43 = arith.constant 0 : index
    %86 = vector.load %arg9[%c0_42, %c0_43] : memref<8x128xf32, #tpu.memory_space<vmem>>, vector<8x128xf32>
    tpu.vector_store %arg9[%c0_42, %c0_43], %85 {strides = array<i32>} : memref<8x128xf32, #tpu.memory_space<vmem>>, vector<8x128xf32>,
    %87 = vector.extract_strided_slice %6 {offsets = [4, 0], sizes = [1, 128], strides = [1, 1]} : vector<8x128xf32> to vector<1x128xf32>
    %88 = vector.extract_strided_slice %8 {offsets = [4, 0], sizes = [1, 128], strides = [1, 1]} : vector<8x128xf32> to vector<1x128xf32>
    %89 = vector.extract_strided_slice %10 {offsets = [4, 0], sizes = [1, 128], strides = [1, 1]} : vector<8x128xf32> to vector<1x128xf32>
    %c0_44 = arith.constant 0 : index
    %c0_45 = arith.constant 0 : index
    %90 = vector.load %arg5[%c0_44, %c0_45] : memref<8x128xf32, #tpu.memory_space<vmem>>, vector<8x128xf32>
    %91 = vector.broadcast %87 : vector<1x128xf32> to vector<8x128xf32>
    %92 = arith.subf %90, %91 : vector<8x128xf32>
    %93 = arith.mulf %92, %92 : vector<8x128xf32>
    %c0_46 = arith.constant 0 : index
    %c0_47 = arith.constant 0 : index
    %94 = vector.load %arg6[%c0_46, %c0_47] : memref<8x128xf32, #tpu.memory_space<vmem>>, vector<8x128xf32>
    %95 = vector.broadcast %88 : vector<1x128xf32> to vector<8x128xf32>
    %96 = arith.mulf %95, %94 : vector<8x128xf32>
    %97 = arith.mulf %93, %96 : vector<8x128xf32>
    %c0_48 = arith.constant 0 : index
    %c0_49 = arith.constant 0 : index
    %98 = vector.load %arg7[%c0_48, %c0_49] : memref<8x128xf32, #tpu.memory_space<vmem>>, vector<8x128xf32>
    %99 = vector.broadcast %89 : vector<1x128xf32> to vector<8x128xf32>
    %100 = arith.addf %99, %98 : vector<8x128xf32>
    %101 = math.exp %97 : vector<8x128xf32>
    %102 = arith.mulf %100, %101 : vector<8x128xf32>
    %c0_50 = arith.constant 0 : index
    %c0_51 = arith.constant 0 : index
    %103 = vector.load %arg9[%c0_50, %c0_51] : memref<8x128xf32, #tpu.memory_space<vmem>>, vector<8x128xf32>
    %104 = arith.addf %103, %102 : vector<8x128xf32>
    %c0_52 = arith.constant 0 : index
    %c0_53 = arith.constant 0 : index
    %105 = vector.load %arg9[%c0_52, %c0_53] : memref<8x128xf32, #tpu.memory_space<vmem>>, vector<8x128xf32>
    tpu.vector_store %arg9[%c0_52, %c0_53], %104 {strides = array<i32>} : memref<8x128xf32, #tpu.memory_space<vmem>>, vector<8x128xf32>,
    %106 = vector.extract_strided_slice %6 {offsets = [5, 0], sizes = [1, 128], strides = [1, 1]} : vector<8x128xf32> to vector<1x128xf32>
    %107 = vector.extract_strided_slice %8 {offsets = [5, 0], sizes = [1, 128], strides = [1, 1]} : vector<8x128xf32> to vector<1x128xf32>
    %108 = vector.extract_strided_slice %10 {offsets = [5, 0], sizes = [1, 128], strides = [1, 1]} : vector<8x128xf32> to vector<1x128xf32>
    %c0_54 = arith.constant 0 : index
    %c0_55 = arith.constant 0 : index
    %109 = vector.load %arg5[%c0_54, %c0_55] : memref<8x128xf32, #tpu.memory_space<vmem>>, vector<8x128xf32>
    %110 = vector.broadcast %106 : vector<1x128xf32> to vector<8x128xf32>
    %111 = arith.subf %109, %110 : vector<8x128xf32>
    %112 = arith.mulf %111, %111 : vector<8x128xf32>
    %c0_56 = arith.constant 0 : index
    %c0_57 = arith.constant 0 : index
    %113 = vector.load %arg6[%c0_56, %c0_57] : memref<8x128xf32, #tpu.memory_space<vmem>>, vector<8x128xf32>
    %114 = vector.broadcast %107 : vector<1x128xf32> to vector<8x128xf32>
    %115 = arith.mulf %114, %113 : vector<8x128xf32>
    %116 = arith.mulf %112, %115 : vector<8x128xf32>
    %c0_58 = arith.constant 0 : index
    %c0_59 = arith.constant 0 : index
    %117 = vector.load %arg7[%c0_58, %c0_59] : memref<8x128xf32, #tpu.memory_space<vmem>>, vector<8x128xf32>
    %118 = vector.broadcast %108 : vector<1x128xf32> to vector<8x128xf32>
    %119 = arith.addf %118, %117 : vector<8x128xf32>
    %120 = math.exp %116 : vector<8x128xf32>
    %121 = arith.mulf %119, %120 : vector<8x128xf32>
    %c0_60 = arith.constant 0 : index
    %c0_61 = arith.constant 0 : index
    %122 = vector.load %arg9[%c0_60, %c0_61] : memref<8x128xf32, #tpu.memory_space<vmem>>, vector<8x128xf32>
    %123 = arith.addf %122, %121 : vector<8x128xf32>
    %c0_62 = arith.constant 0 : index
    %c0_63 = arith.constant 0 : index
    %124 = vector.load %arg9[%c0_62, %c0_63] : memref<8x128xf32, #tpu.memory_space<vmem>>, vector<8x128xf32>
    tpu.vector_store %arg9[%c0_62, %c0_63], %123 {strides = array<i32>} : memref<8x128xf32, #tpu.memory_space<vmem>>, vector<8x128xf32>,
    %125 = vector.extract_strided_slice %6 {offsets = [6, 0], sizes = [1, 128], strides = [1, 1]} : vector<8x128xf32> to vector<1x128xf32>
    %126 = vector.extract_strided_slice %8 {offsets = [6, 0], sizes = [1, 128], strides = [1, 1]} : vector<8x128xf32> to vector<1x128xf32>
    %127 = vector.extract_strided_slice %10 {offsets = [6, 0], sizes = [1, 128], strides = [1, 1]} : vector<8x128xf32> to vector<1x128xf32>
    %c0_64 = arith.constant 0 : index
    %c0_65 = arith.constant 0 : index
    %128 = vector.load %arg5[%c0_64, %c0_65] : memref<8x128xf32, #tpu.memory_space<vmem>>, vector<8x128xf32>
    %129 = vector.broadcast %125 : vector<1x128xf32> to vector<8x128xf32>
    %130 = arith.subf %128, %129 : vector<8x128xf32>
    %131 = arith.mulf %130, %130 : vector<8x128xf32>
    %c0_66 = arith.constant 0 : index
    %c0_67 = arith.constant 0 : index
    %132 = vector.load %arg6[%c0_66, %c0_67] : memref<8x128xf32, #tpu.memory_space<vmem>>, vector<8x128xf32>
    %133 = vector.broadcast %126 : vector<1x128xf32> to vector<8x128xf32>
    %134 = arith.mulf %133, %132 : vector<8x128xf32>
    %135 = arith.mulf %131, %134 : vector<8x128xf32>
    %c0_68 = arith.constant 0 : index
    %c0_69 = arith.constant 0 : index
    %136 = vector.load %arg7[%c0_68, %c0_69] : memref<8x128xf32, #tpu.memory_space<vmem>>, vector<8x128xf32>
    %137 = vector.broadcast %127 : vector<1x128xf32> to vector<8x128xf32>
    %138 = arith.addf %137, %136 : vector<8x128xf32>
    %139 = math.exp %135 : vector<8x128xf32>
    %140 = arith.mulf %138, %139 : vector<8x128xf32>
    %c0_70 = arith.constant 0 : index
    %c0_71 = arith.constant 0 : index
    %141 = vector.load %arg9[%c0_70, %c0_71] : memref<8x128xf32, #tpu.memory_space<vmem>>, vector<8x128xf32>
    %142 = arith.addf %141, %140 : vector<8x128xf32>
    %c0_72 = arith.constant 0 : index
    %c0_73 = arith.constant 0 : index
    %143 = vector.load %arg9[%c0_72, %c0_73] : memref<8x128xf32, #tpu.memory_space<vmem>>, vector<8x128xf32>
    tpu.vector_store %arg9[%c0_72, %c0_73], %142 {strides = array<i32>} : memref<8x128xf32, #tpu.memory_space<vmem>>, vector<8x128xf32>,
    %144 = vector.extract_strided_slice %6 {offsets = [7, 0], sizes = [1, 128], strides = [1, 1]} : vector<8x128xf32> to vector<1x128xf32>
    %145 = vector.extract_strided_slice %8 {offsets = [7, 0], sizes = [1, 128], strides = [1, 1]} : vector<8x128xf32> to vector<1x128xf32>
    %146 = vector.extract_strided_slice %10 {offsets = [7, 0], sizes = [1, 128], strides = [1, 1]} : vector<8x128xf32> to vector<1x128xf32>
    %c0_74 = arith.constant 0 : index
    %c0_75 = arith.constant 0 : index
    %147 = vector.load %arg5[%c0_74, %c0_75] : memref<8x128xf32, #tpu.memory_space<vmem>>, vector<8x128xf32>
    %148 = vector.broadcast %144 : vector<1x128xf32> to vector<8x128xf32>
    %149 = arith.subf %147, %148 : vector<8x128xf32>
    %150 = arith.mulf %149, %149 : vector<8x128xf32>
    %c0_76 = arith.constant 0 : index
    %c0_77 = arith.constant 0 : index
    %151 = vector.load %arg6[%c0_76, %c0_77] : memref<8x128xf32, #tpu.memory_space<vmem>>, vector<8x128xf32>
    %152 = vector.broadcast %145 : vector<1x128xf32> to vector<8x128xf32>
    %153 = arith.mulf %152, %151 : vector<8x128xf32>
    %154 = arith.mulf %150, %153 : vector<8x128xf32>
    %c0_78 = arith.constant 0 : index
    %c0_79 = arith.constant 0 : index
    %155 = vector.load %arg7[%c0_78, %c0_79] : memref<8x128xf32, #tpu.memory_space<vmem>>, vector<8x128xf32>
    %156 = vector.broadcast %146 : vector<1x128xf32> to vector<8x128xf32>
    %157 = arith.addf %156, %155 : vector<8x128xf32>
    %158 = math.exp %154 : vector<8x128xf32>
    %159 = arith.mulf %157, %158 : vector<8x128xf32>
    %c0_80 = arith.constant 0 : index
    %c0_81 = arith.constant 0 : index
    %160 = vector.load %arg9[%c0_80, %c0_81] : memref<8x128xf32, #tpu.memory_space<vmem>>, vector<8x128xf32>
    %161 = arith.addf %160, %159 : vector<8x128xf32>
    %c0_82 = arith.constant 0 : index
    %c0_83 = arith.constant 0 : index
    %162 = vector.load %arg9[%c0_82, %c0_83] : memref<8x128xf32, #tpu.memory_space<vmem>>, vector<8x128xf32>
    tpu.vector_store %arg9[%c0_82, %c0_83], %161 {strides = array<i32>} : memref<8x128xf32, #tpu.memory_space<vmem>>, vector<8x128xf32>,
    %c1_i32 = arith.constant 1 : i32
    %c0_i32_84 = arith.constant 0 : i32
    %163 = arith.cmpi eq, %arg1, %c0_i32_84 : i32
    %164 = arith.extui %163 : i1 to i32
    %c0_i32_85 = arith.constant 0 : i32
    %165 = arith.cmpi ne, %164, %c0_i32_85 : i32
    scf.if %165 {
      %c0_86 = arith.constant 0 : index
      %c0_87 = arith.constant 0 : index
      %166 = vector.load %arg9[%c0_86, %c0_87] : memref<8x128xf32, #tpu.memory_space<vmem>>, vector<8x128xf32>
      %c0_88 = arith.constant 0 : index
      %c0_89 = arith.constant 0 : index
      %167 = vector.load %arg8[%c0_88, %c0_89] : memref<8x128xf32, #tpu.memory_space<vmem>>, vector<8x128xf32>
      tpu.vector_store %arg8[%c0_88, %c0_89], %166 {strides = array<i32>} : memref<8x128xf32, #tpu.memory_space<vmem>>, vector<8x128xf32>,
    } else {
    }
    return
  }
  func.func @transform_0(%arg0: i32, %arg1: i32) -> (i32, i32) {
    %c0_i32 = arith.constant 0 : i32
    %c0_i32_0 = arith.constant 0 : i32
    return %arg0, %c0_i32 : i32, i32
  }
  func.func @transform_1(%arg0: i32, %arg1: i32) -> (i32, i32) {
    %c0_i32 = arith.constant 0 : i32
    %c0_i32_0 = arith.constant 0 : i32
    return %arg0, %c0_i32 : i32, i32
  }
  func.func @transform_2(%arg0: i32, %arg1: i32) -> (i32, i32) {
    %c0_i32 = arith.constant 0 : i32
    %c0_i32_0 = arith.constant 0 : i32
    return %arg0, %c0_i32 : i32, i32
  }
  func.func @transform_3(%arg0: i32, %arg1: i32) -> (i32, i32) {
    %c0_i32 = arith.constant 0 : i32
    %c0_i32_0 = arith.constant 0 : i32
    return %arg1, %c0_i32 : i32, i32
  }
  func.func @transform_4(%arg0: i32, %arg1: i32) -> (i32, i32) {
    %c0_i32 = arith.constant 0 : i32
    %c0_i32_0 = arith.constant 0 : i32
    return %arg1, %c0_i32 : i32, i32
  }
  func.func @transform_5(%arg0: i32, %arg1: i32) -> (i32, i32) {
    %c0_i32 = arith.constant 0 : i32
    %c0_i32_0 = arith.constant 0 : i32
    return %arg1, %c0_i32 : i32, i32
  }
  func.func @transform_6(%arg0: i32, %arg1: i32) -> (i32, i32) {
    %c0_i32 = arith.constant 0 : i32
    %c0_i32_0 = arith.constant 0 : i32
    return %arg0, %c0_i32 : i32, i32
  }
}

</mosaic_0001>

<llo_original>
// kernel: tile.23
$region0: #{tile.23}
  #allocation0 [shape = 's32[1]{0}', space=sflag, size = 0x4, scoped, tag = 'scoped memory for tile.23']
  %s0 = inlined_call_operand.vmem [shape: f32[8], index: 0, kind: input, shape index: {}]
  %s1 = inlined_call_operand.vmem [shape: f32[8,8], index: 1, kind: output, shape index: {}]
  // Predicated region
  $region2: #{tile.23} parent=0 // pred_check
    _
  $region3: #{tile.23} parent=0 // pred_check_branch
    %3 = sbr.rel (0) target = $region5
  $region4: #{tile.23} parent=0 // pred_region
    _
  $region5: #{tile.23} parent=0 // pred_fallthru
    _
  %v4 = vld [vmem:[%s0] ss:$0 sm:$0xff]
  %5 = vst [vmem:[%s1] sm:$0xff] %v4

// kernel: tile.29
$region0: #{tile.29}
  %s0 = inlined_call_operand.vmem [shape: f32[16,2,64], index: 0, kind: input, shape index: {}]
  %s1 = inlined_call_operand.vmem [shape: f32[16,128], index: 1, kind: output, shape index: {}]
  $region1: #{tile.29} parent=0
    #allocation0 [shape = 'u8[65536]{0}', space=vmem, size = 0x10000, scoped, tag = 'scoped mem for input reshape']
    %s3 = ssub.s32 4, 1
    %s4 = scalar_lea.vmem %s0, 30
    %v5 = vld [vmem:[%s4] sm:%s3]
    %s6 = scalar_lea.vmem [#allocation0], 120
    %7 = vst [vmem:[%s6] sm:%s3] %v5
    %s8 = scalar_lea.vmem %s0, 28
    %v9 = vld [vmem:[%s8] sm:%s3]
    %s10 = scalar_lea.vmem [#allocation0], 112
    %11 = vst [vmem:[%s10] sm:%s3] %v9
    %s12 = scalar_lea.vmem %s0, 26
    %v13 = vld [vmem:[%s12] sm:%s3]
    %s14 = scalar_lea.vmem [#allocation0], 104
    %15 = vst [vmem:[%s14] sm:%s3] %v13
    %s16 = scalar_lea.vmem %s0, 24
    %v17 = vld [vmem:[%s16] sm:%s3]
    %s18 = scalar_lea.vmem [#allocation0], 96
    %19 = vst [vmem:[%s18] sm:%s3] %v17
    %s20 = scalar_lea.vmem %s0, 22
    %v21 = vld [vmem:[%s20] sm:%s3]
    %s22 = scalar_lea.vmem [#allocation0], 88
    %23 = vst [vmem:[%s22] sm:%s3] %v21
    %s24 = scalar_lea.vmem %s0, 20
    %v25 = vld [vmem:[%s24] sm:%s3]
    %s26 = scalar_lea.vmem [#allocation0], 80
    %27 = vst [vmem:[%s26] sm:%s3] %v25
    %s28 = scalar_lea.vmem %s0, 18
    %v29 = vld [vmem:[%s28] sm:%s3]
    %s30 = scalar_lea.vmem [#allocation0], 72
    %31 = vst [vmem:[%s30] sm:%s3] %v29
    %s32 = scalar_lea.vmem %s0, 16
    %v33 = vld [vmem:[%s32] sm:%s3]
    %s34 = scalar_lea.vmem [#allocation0], 64
    %35 = vst [vmem:[%s34] sm:%s3] %v33
    %s36 = scalar_lea.vmem %s0, 14
    %v37 = vld [vmem:[%s36] sm:%s3]
    %s38 = scalar_lea.vmem [#allocation0], 56
    %39 = vst [vmem:[%s38] sm:%s3] %v37
    %s40 = scalar_lea.vmem %s0, 12
    %v41 = vld [vmem:[%s40] sm:%s3]
    %s42 = scalar_lea.vmem [#allocation0], 48
    %43 = vst [vmem:[%s42] sm:%s3] %v41
    %s44 = scalar_lea.vmem %s0, 10
    %v45 = vld [vmem:[%s44] sm:%s3]
    %s46 = scalar_lea.vmem [#allocation0], 40
    %47 = vst [vmem:[%s46] sm:%s3] %v45
    %s48 = scalar_lea.vmem %s0, 8
    %v49 = vld [vmem:[%s48] sm:%s3]
    %s50 = scalar_lea.vmem [#allocation0], 32
    %51 = vst [vmem:[%s50] sm:%s3] %v49
    %s52 = scalar_lea.vmem %s0, 6
    %v53 = vld [vmem:[%s52] sm:%s3]
    %s54 = scalar_lea.vmem [#allocation0], 24
    %55 = vst [vmem:[%s54] sm:%s3] %v53
    %s56 = scalar_lea.vmem %s0, 4
    %v57 = vld [vmem:[%s56] sm:%s3]
    %s58 = scalar_lea.vmem [#allocation0], 16
    %59 = vst [vmem:[%s58] sm:%s3] %v57
    %s60 = scalar_lea.vmem %s0, 2
    %v61 = vld [vmem:[%s60] sm:%s3]
    %s62 = scalar_lea.vmem [#allocation0], 8
    %63 = vst [vmem:[%s62] sm:%s3] %v61
    %v64 = vld [vmem:[%s0] sm:%s3]
    %65 = vst [vmem:[#allocation0] sm:%s3] %v64
    %v66 = vld [vmem:[#allocation0] ss:$8 sm:$0xf]
    %v67 = vld [vmem:[#allocation0] ss:$8 sm:$0xf0]
    %vm68 = vcmask 1047556
    %v69 = vsel %vm68, %v67, %v66
    %vm70 = vcmask 523264
    %71 = vst.msk [vmem:[%s1] sm:$0xff] %vm70, %v69
    %s72 = scalar_lea.vmem [#allocation0], 64
    %v73 = vld [vmem:[%s72] ss:$8 sm:$0xf]
    %s74 = scalar_lea.vmem [#allocation0], 64
    %v75 = vld [vmem:[%s74] ss:$8 sm:$0xf0]
    %vm76 = vcmask 1047556
    %v77 = vsel %vm76, %v75, %v73
    %vm78 = vcmask 523264
    %s79 = scalar_lea.vmem %s1, 8
    %80 = vst.msk [vmem:[%s79] sm:$0xff] %vm78, %v77
    %s81 = scalar_lea.vmem [#allocation0], 1
    %v82 = vld [vmem:[%s81] ss:$8 sm:$0xf]
    %s83 = scalar_lea.vmem [#allocation0], 1
    %v84 = vld [vmem:[%s83] ss:$8 sm:$0xf0]
    %vm85 = vcmask 1047556
    %v86 = vsel %vm85, %v84, %v82
    %87 = vrot.lane.b32.xlu0 %v86, 64
    %v88 = vpop.permute.xlu0 %87
    %vm89 = vcmask 1048064
    %90 = vst.msk [vmem:[%s1] sm:$0xff] %vm89, %v88
    %s91 = scalar_lea.vmem [#allocation0], 65
    %v92 = vld [vmem:[%s91] ss:$8 sm:$0xf]
    %s93 = scalar_lea.vmem [#allocation0], 65
    %v94 = vld [vmem:[%s93] ss:$8 sm:$0xf0]
    %vm95 = vcmask 1047556
    %v96 = vsel %vm95, %v94, %v92
    %97 = vrot.lane.b32.xlu0 %v96, 64
    %v98 = vpop.permute.xlu0 %97
    %vm99 = vcmask 1048064
    %s100 = scalar_lea.vmem %s1, 8
    %101 = vst.msk [vmem:[%s100] sm:$0xff] %vm99, %v98

// kernel: sub.1
$region0: #{sub.1}
  #allocation0 [shape = 's32[1]{0}', space=sflag, size = 0x4, scoped, tag = 'scoped memory for sub.1']
  %s0 = inlined_call_operand.vmem [shape: f32[8,128], index: 0, kind: input, shape index: {}]
  %s1 = inlined_call_operand.vmem [shape: f32[8,128], index: 1, kind: input, shape index: {}]
  %s2 = inlined_call_operand.vmem [shape: f32[8,128], index: 2, kind: output, shape index: {}]
  %v3 = vld [vmem:[%s0] sm:$0xff]
  %v4 = vld [vmem:[%s1] sm:$0xff]
  %5 = xla_tuple %v3, %v4
  %6 = xla_tuple %5
  %v7 = vsub.f32 %v3, %v4
  %8 = xla_tuple %v7
  %9 = vst [vmem:[%s2] sm:$0xff] %v7

// kernel: inductive_radial_biasing_force.1
$region0: #{inductive_radial_biasing_force.1}
  #allocation0 [shape = 'u32[]', space=smem, size = 0x4, offset = 0x4, fixed_abs, tag = 'smem constant byte address 0x4 - core index']
  #allocation1 [shape = 'u32[72,128]{1,0:T(1,128)}', space=vmem, size = 0x9000, scoped, tag = 'internal scratch']
  #allocation2 [shape = 'f32[8,128]{1,0:T(8,128)}', space=vmem, size = 0x1000, scoped, tag = 'scratch operand']
  %s0 = inlined_call_operand.vmem [shape: f32[16,128], index: 0, kind: input, shape index: {}]
  %s1 = inlined_call_operand.vmem [shape: f32[16,128], index: 1, kind: input, shape index: {}]
  %s2 = inlined_call_operand.vmem [shape: f32[16,128], index: 2, kind: input, shape index: {}]
  %s3 = inlined_call_operand.vmem [shape: f32[8,128], index: 3, kind: input, shape index: {}]
  %s4 = inlined_call_operand.vmem [shape: f32[8,128], index: 4, kind: input, shape index: {}]
  %s5 = inlined_call_operand.vmem [shape: f32[8,128], index: 5, kind: input, shape index: {}]
  %s6 = inlined_call_operand.vmem [shape: f32[16,128], index: 6, kind: output, shape index: {}]
  %s7 = sld [smem:[#allocation0]]
  $region65: #{inductive_radial_biasing_force.1} parent=0
    _
  %s9 = ssub.s32 1, %s7
  %s10 = scalar_select 0, %s9, %s7
  loop: start=0, step=1, limit=4
  $region2: #{inductive_radial_biasing_force.1} parent=0 // loop_pre_header
    _
  $region3: #{inductive_radial_biasing_force.1} parent=0 // loop_header
    %s12 = sphi 0, %s16
    %p13 = scmp.ge.s32.totalorder %s12, 4
    %s19 = sphi 0, %s31
    %s20 = sphi 0, %s27
    %s21 = sphi 0, %s19
    %s22 = sphi 0, %s20
    %s23 = sphi 0, %s21
    %s24 = sphi 0, %s22
    %s34 = sphi 0, %s36
    %s37 = sphi 0, %s34
    %s38 = sphi 0, %s37
    %s54 = sphi 0, %s38
    %s60 = sphi 0, %s62
    %s63 = sphi 0, %s60
    %s64 = sphi 0, %s63
    %s80 = sphi 0, %s64
    %s86 = sphi 0, %s88
    %s89 = sphi 0, %s86
    %s90 = sphi 0, %s89
    %s106 = sphi 0, %s90
    %s112 = sphi 0, %s114
    %s115 = sphi 0, %s112
    %s116 = sphi 0, %s115
    %s132 = sphi 0, %s116
    %s138 = sphi 0, %s140
    %s141 = sphi 0, %s138
    %s142 = sphi 0, %s141
    %s158 = sphi 0, %s142
    %s164 = sphi 0, %s166
    %s167 = sphi 0, %s164
    %s168 = sphi 0, %s167
    %s184 = sphi 0, %s168
    %s190 = sphi 0, %s192
    %s193 = sphi 0, %s190
    %s194 = sphi 0, %s193
    %s210 = sphi 0, %s194
  $region4: #{inductive_radial_biasing_force.1} parent=0 // loop_header_branch
    %15 = sbr.rel (%p13) target = $region8
  $region5: #{inductive_radial_biasing_force.1} parent=0 // loop_body
    %s17 = ssub.s32 %s12, 1
    %s18 = ssub.s32 %s12, 2
    %s25 = sadd.s32 1, %s20
    %p26 = scmp.ge.s32.totalorder %s25, 1
    %s27 = scalar_select %p26, 0, %s25
    %s28 = sadd.s32 1, %s19
    %s29 = scalar_select %p26, %s28, %s19
    %p30 = scmp.ge.s32.totalorder %s29, 2
    %s31 = scalar_select %p30, 0, %s29
    %s32 = ssub.s32 %s19, %s31
    %p33 = scmp.eq.s32.totalorder %s32, 0
    %s35 = sadd.s32 %s34, 1
    %s36 = scalar_select %p33, %s34, %s35
    %p39 = pneg %p33
    %p40 = scmp.eq.s32.totalorder %s12, 1
    %p41 = por %p39, %p40
    %p42 = scmp.ne.s32.totalorder %s34, %s37
    %p43 = scmp.eq.s32.totalorder %s12, 0
    %p44 = por %p42, %p43
    %p45 = scmp.ne.s32.totalorder %s34, %s37
    %p46 = scmp.eq.s32.totalorder %s17, 1
    %p47 = por %p45, %p46
    %p48 = scmp.ne.s32.totalorder %s37, %s38
    %p49 = scmp.eq.s32.totalorder %s17, 0
    %p50 = por %p48, %p49
    %p51 = scmp.ne.s32.totalorder %s37, %s38
    %p52 = scmp.eq.s32.totalorder %s18, 1
    %p53 = por %p51, %p52
    %p55 = scmp.ne.s32.totalorder %s38, %s54
    %p56 = scmp.eq.s32.totalorder %s18, 0
    %p57 = por %p55, %p56
    %s58 = ssub.s32 %s19, %s31
    %p59 = scmp.eq.s32.totalorder %s58, 0
    %s61 = sadd.s32 %s60, 1
    %s62 = scalar_select %p59, %s60, %s61
    %p65 = pneg %p59
    %p66 = scmp.eq.s32.totalorder %s12, 1
    %p67 = por %p65, %p66
    %p68 = scmp.ne.s32.totalorder %s60, %s63
    %p69 = scmp.eq.s32.totalorder %s12, 0
    %p70 = por %p68, %p69
    %p71 = scmp.ne.s32.totalorder %s60, %s63
    %p72 = scmp.eq.s32.totalorder %s17, 1
    %p73 = por %p71, %p72
    %p74 = scmp.ne.s32.totalorder %s63, %s64
    %p75 = scmp.eq.s32.totalorder %s17, 0
    %p76 = por %p74, %p75
    %p77 = scmp.ne.s32.totalorder %s63, %s64
    %p78 = scmp.eq.s32.totalorder %s18, 1
    %p79 = por %p77, %p78
    %p81 = scmp.ne.s32.totalorder %s64, %s80
    %p82 = scmp.eq.s32.totalorder %s18, 0
    %p83 = por %p81, %p82
    %s84 = ssub.s32 %s19, %s31
    %p85 = scmp.eq.s32.totalorder %s84, 0
    %s87 = sadd.s32 %s86, 1
    %s88 = scalar_select %p85, %s86, %s87
    %p91 = pneg %p85
    %p92 = scmp.eq.s32.totalorder %s12, 1
    %p93 = por %p91, %p92
    %p94 = scmp.ne.s32.totalorder %s86, %s89
    %p95 = scmp.eq.s32.totalorder %s12, 0
    %p96 = por %p94, %p95
    %p97 = scmp.ne.s32.totalorder %s86, %s89
    %p98 = scmp.eq.s32.totalorder %s17, 1
    %p99 = por %p97, %p98
    %p100 = scmp.ne.s32.totalorder %s89, %s90
    %p101 = scmp.eq.s32.totalorder %s17, 0
    %p102 = por %p100, %p101
    %p103 = scmp.ne.s32.totalorder %s89, %s90
    %p104 = scmp.eq.s32.totalorder %s18, 1
    %p105 = por %p103, %p104
    %p107 = scmp.ne.s32.totalorder %s90, %s106
    %p108 = scmp.eq.s32.totalorder %s18, 0
    %p109 = por %p107, %p108
    %s110 = ssub.s32 %s20, %s27
    %p111 = scmp.eq.s32.totalorder %s110, 0
    %s113 = sadd.s32 %s112, 1
    %s114 = scalar_select %p111, %s112, %s113
    %p117 = pneg %p111
    %p118 = scmp.eq.s32.totalorder %s12, 1
    %p119 = por %p117, %p118
    %p120 = scmp.ne.s32.totalorder %s112, %s115
    %p121 = scmp.eq.s32.totalorder %s12, 0
    %p122 = por %p120, %p121
    %p123 = scmp.ne.s32.totalorder %s112, %s115
    %p124 = scmp.eq.s32.totalorder %s17, 1
    %p125 = por %p123, %p124
    %p126 = scmp.ne.s32.totalorder %s115, %s116
    %p127 = scmp.eq.s32.totalorder %s17, 0
    %p128 = por %p126, %p127
    %p129 = scmp.ne.s32.totalorder %s115, %s116
    %p130 = scmp.eq.s32.totalorder %s18, 1
    %p131 = por %p129, %p130
    %p133 = scmp.ne.s32.totalorder %s116, %s132
    %p134 = scmp.eq.s32.totalorder %s18, 0
    %p135 = por %p133, %p134
    %s136 = ssub.s32 %s20, %s27
    %p137 = scmp.eq.s32.totalorder %s136, 0
    %s139 = sadd.s32 %s138, 1
    %s140 = scalar_select %p137, %s138, %s139
    %p143 = pneg %p137
    %p144 = scmp.eq.s32.totalorder %s12, 1
    %p145 = por %p143, %p144
    %p146 = scmp.ne.s32.totalorder %s138, %s141
    %p147 = scmp.eq.s32.totalorder %s12, 0
    %p148 = por %p146, %p147
    %p149 = scmp.ne.s32.totalorder %s138, %s141
    %p150 = scmp.eq.s32.totalorder %s17, 1
    %p151 = por %p149, %p150
    %p152 = scmp.ne.s32.totalorder %s141, %s142
    %p153 = scmp.eq.s32.totalorder %s17, 0
    %p154 = por %p152, %p153
    %p155 = scmp.ne.s32.totalorder %s141, %s142
    %p156 = scmp.eq.s32.totalorder %s18, 1
    %p157 = por %p155, %p156
    %p159 = scmp.ne.s32.totalorder %s142, %s158
    %p160 = scmp.eq.s32.totalorder %s18, 0
    %p161 = por %p159, %p160
    %s162 = ssub.s32 %s20, %s27
    %p163 = scmp.eq.s32.totalorder %s162, 0
    %s165 = sadd.s32 %s164, 1
    %s166 = scalar_select %p163, %s164, %s165
    %p169 = pneg %p163
    %p170 = scmp.eq.s32.totalorder %s12, 1
    %p171 = por %p169, %p170
    %p172 = scmp.ne.s32.totalorder %s164, %s167
    %p173 = scmp.eq.s32.totalorder %s12, 0
    %p174 = por %p172, %p173
    %p175 = scmp.ne.s32.totalorder %s164, %s167
    %p176 = scmp.eq.s32.totalorder %s17, 1
    %p177 = por %p175, %p176
    %p178 = scmp.ne.s32.totalorder %s167, %s168
    %p179 = scmp.eq.s32.totalorder %s17, 0
    %p180 = por %p178, %p179
    %p181 = scmp.ne.s32.totalorder %s167, %s168
    %p182 = scmp.eq.s32.totalorder %s18, 1
    %p183 = por %p181, %p182
    %p185 = scmp.ne.s32.totalorder %s168, %s184
    %p186 = scmp.eq.s32.totalorder %s18, 0
    %p187 = por %p185, %p186
    %s188 = ssub.s32 %s19, %s31
    %p189 = scmp.eq.s32.totalorder %s188, 0
    %s191 = sadd.s32 %s190, 1
    %s192 = scalar_select %p189, %s190, %s191
    %p195 = pneg %p189
    %p196 = scmp.eq.s32.totalorder %s12, 1
    %p197 = por %p195, %p196
    %p198 = scmp.ne.s32.totalorder %s190, %s193
    %p199 = scmp.eq.s32.totalorder %s12, 0
    %p200 = por %p198, %p199
    %p201 = scmp.ne.s32.totalorder %s190, %s193
    %p202 = scmp.eq.s32.totalorder %s17, 1
    %p203 = por %p201, %p202
    %p204 = scmp.ne.s32.totalorder %s193, %s194
    %p205 = scmp.eq.s32.totalorder %s17, 0
    %p206 = por %p204, %p205
    %p207 = scmp.ne.s32.totalorder %s193, %s194
    %p208 = scmp.eq.s32.totalorder %s18, 1
    %p209 = por %p207, %p208
    %p211 = scmp.ne.s32.totalorder %s194, %s210
    %p212 = scmp.eq.s32.totalorder %s18, 0
    %p213 = por %p211, %p212
    %p214 = scmp.le.s32.totalorder 1, %s12
    %p215 = scmp.lt.s32.totalorder %s12, 3
    %p216 = pnand %p214, %p215
    %p217 = pneg %p216
    // Predicated region
    $region9: #{inductive_radial_biasing_force.1} parent=5 // pred_check
      _
    $region10: #{inductive_radial_biasing_force.1} parent=5 // pred_check_branch
      %219 = sbr.rel (%p216) target = $region12
    $region11: #{inductive_radial_biasing_force.1} parent=5 // pred_region
      %s220 = ssub.s32 %s12, 1
      // Predicated region
      $region13: #{inductive_radial_biasing_force.1} parent=11 // pred_check
        %p221 = pneg %p128
      $region14: #{inductive_radial_biasing_force.1} parent=11 // pred_check_branch
        %223 = sbr.rel (%p221) target = $region16
      $region15: #{inductive_radial_biasing_force.1} parent=11 // pred_region
        %p224 = scmp.lt.s32.totalorder %s22, 0
        %s225 = scalar_select %p224, %s22, 0
        %s226 = smul.addr %s225, 8
        %s227 = scalar_lea.vmem %s3, %s226
      $region16: #{inductive_radial_biasing_force.1} parent=11 // pred_fallthru
        _
      // Predicated region
      $region17: #{inductive_radial_biasing_force.1} parent=11 // pred_check
        %p228 = pneg %p154
      $region18: #{inductive_radial_biasing_force.1} parent=11 // pred_check_branch
        %230 = sbr.rel (%p228) target = $region20
      $region19: #{inductive_radial_biasing_force.1} parent=11 // pred_region
        %p231 = scmp.lt.s32.totalorder %s22, 0
        %s232 = scalar_select %p231, %s22, 0
        %s233 = smul.addr %s232, 8
        %s234 = scalar_lea.vmem %s4, %s233
      $region20: #{inductive_radial_biasing_force.1} parent=11 // pred_fallthru
        _
      // Predicated region
      $region21: #{inductive_radial_biasing_force.1} parent=11 // pred_check
        %p235 = pneg %p180
      $region22: #{inductive_radial_biasing_force.1} parent=11 // pred_check_branch
        %237 = sbr.rel (%p235) target = $region24
      $region23: #{inductive_radial_biasing_force.1} parent=11 // pred_region
        %p238 = scmp.lt.s32.totalorder %s22, 0
        %s239 = scalar_select %p238, %s22, 0
        %s240 = smul.addr %s239, 8
        %s241 = scalar_lea.vmem %s5, %s240
      $region24: #{inductive_radial_biasing_force.1} parent=11 // pred_fallthru
        _
    $region12: #{inductive_radial_biasing_force.1} parent=5 // pred_fallthru
      _
    %p242 = scmp.lt.s32.totalorder %s12, 2
    // Predicated region
    $region25: #{inductive_radial_biasing_force.1} parent=5 // pred_check
      %p243 = pneg %p242
    $region26: #{inductive_radial_biasing_force.1} parent=5 // pred_check_branch
      %245 = sbr.rel (%p243) target = $region28
    $region27: #{inductive_radial_biasing_force.1} parent=5 // pred_region
      // Predicated region
      $region29: #{inductive_radial_biasing_force.1} parent=27 // pred_check
        %p246 = pneg %p44
      $region30: #{inductive_radial_biasing_force.1} parent=27 // pred_check_branch
        %248 = sbr.rel (%p246) target = $region32
      $region31: #{inductive_radial_biasing_force.1} parent=27 // pred_region
        %p249 = scmp.lt.s32.totalorder %s19, 1
        %s250 = scalar_select %p249, %s19, 1
        %s251 = smul.addr %s250, 8
        %s252 = scalar_lea.vmem %s0, %s251
      $region32: #{inductive_radial_biasing_force.1} parent=27 // pred_fallthru
        _
      // Predicated region
      $region33: #{inductive_radial_biasing_force.1} parent=27 // pred_check
        %p253 = pneg %p70
      $region34: #{inductive_radial_biasing_force.1} parent=27 // pred_check_branch
        %255 = sbr.rel (%p253) target = $region36
      $region35: #{inductive_radial_biasing_force.1} parent=27 // pred_region
        %p256 = scmp.lt.s32.totalorder %s19, 1
        %s257 = scalar_select %p256, %s19, 1
        %s258 = smul.addr %s257, 8
        %s259 = scalar_lea.vmem %s1, %s258
      $region36: #{inductive_radial_biasing_force.1} parent=27 // pred_fallthru
        _
      // Predicated region
      $region37: #{inductive_radial_biasing_force.1} parent=27 // pred_check
        %p260 = pneg %p96
      $region38: #{inductive_radial_biasing_force.1} parent=27 // pred_check_branch
        %262 = sbr.rel (%p260) target = $region40
      $region39: #{inductive_radial_biasing_force.1} parent=27 // pred_region
        %p263 = scmp.lt.s32.totalorder %s19, 1
        %s264 = scalar_select %p263, %s19, 1
        %s265 = smul.addr %s264, 8
        %s266 = scalar_lea.vmem %s2, %s265
      $region40: #{inductive_radial_biasing_force.1} parent=27 // pred_fallthru
        _
    $region28: #{inductive_radial_biasing_force.1} parent=5 // pred_fallthru
      _
    %p267 = scmp.le.s32.totalorder 1, %s12
    %p268 = scmp.lt.s32.totalorder %s12, 3
    %p269 = pnand %p267, %p268
    %p270 = pneg %p269
    // Predicated region
    $region41: #{inductive_radial_biasing_force.1} parent=5 // pred_check
      _
    $region42: #{inductive_radial_biasing_force.1} parent=5 // pred_check_branch
      %272 = sbr.rel (%p269) target = $region44
    $region43: #{inductive_radial_biasing_force.1} parent=5 // pred_region
      %s273 = ssub.s32 %s12, 1
      %p274 = scmp.lt.s32.totalorder %s21, 1
      %s275 = scalar_select %p274, %s21, 1
      %s276 = smul.addr %s275, 8
      %s277 = scalar_lea.vmem %s0, %s276
      %p278 = pneg %p50
      %p279 = pneg %p47
      %p280 = scmp.lt.s32.totalorder %s21, 1
      %s281 = scalar_select %p280, %s21, 1
      %s282 = smul.addr %s281, 8
      %s283 = scalar_lea.vmem %s1, %s282
      %p284 = pneg %p76
      %p285 = pneg %p73
      %p286 = scmp.lt.s32.totalorder %s21, 1
      %s287 = scalar_select %p286, %s21, 1
      %s288 = smul.addr %s287, 8
      %s289 = scalar_lea.vmem %s2, %s288
      %p290 = pneg %p102
      %p291 = pneg %p99
      %p292 = scmp.lt.s32.totalorder %s22, 0
      %s293 = scalar_select %p292, %s22, 0
      %s294 = smul.addr %s293, 8
      %s295 = scalar_lea.vmem %s3, %s294
      %p296 = pneg %p128
      %p297 = pneg %p125
      %p298 = scmp.lt.s32.totalorder %s22, 0
      %s299 = scalar_select %p298, %s22, 0
      %s300 = smul.addr %s299, 8
      %s301 = scalar_lea.vmem %s4, %s300
      %p302 = pneg %p154
      %p303 = pneg %p151
      %p304 = scmp.lt.s32.totalorder %s22, 0
      %s305 = scalar_select %p304, %s22, 0
      %s306 = smul.addr %s305, 8
      %s307 = scalar_lea.vmem %s5, %s306
      %p308 = pneg %p180
      %p309 = pneg %p177
      %p310 = pneg %p206
      %p311 = pneg %p203
      %p312 = scmp.lt.s32.totalorder %s21, 1
      %s313 = scalar_select %p312, %s21, 1
      %s314 = smul.addr %s313, 8
      %s315 = scalar_lea.vmem %s6, %s314
      %p316 = scmp.lt.s32.totalorder %s21, 1
      %s317 = scalar_select %p316, %s21, 1
      %s318 = smul.addr %s317, 8
      %s319 = scalar_lea.vmem %s0, %s318
      %p320 = scmp.lt.s32.totalorder %s21, 1
      %s321 = scalar_select %p320, %s21, 1
      %s322 = smul.addr %s321, 8
      %s323 = scalar_lea.vmem %s1, %s322
      %p324 = scmp.lt.s32.totalorder %s21, 1
      %s325 = scalar_select %p324, %s21, 1
      %s326 = smul.addr %s325, 8
      %s327 = scalar_lea.vmem %s2, %s326
      %p328 = scmp.lt.s32.totalorder %s22, 0
      %s329 = scalar_select %p328, %s22, 0
      %s330 = smul.addr %s329, 8
      %s331 = scalar_lea.vmem %s3, %s330
      %p332 = scmp.lt.s32.totalorder %s22, 0
      %s333 = scalar_select %p332, %s22, 0
      %s334 = smul.addr %s333, 8
      %s335 = scalar_lea.vmem %s4, %s334
      %p336 = scmp.lt.s32.totalorder %s22, 0
      %s337 = scalar_select %p336, %s22, 0
      %s338 = smul.addr %s337, 8
      %s339 = scalar_lea.vmem %s5, %s338
      %p340 = scmp.lt.s32.totalorder %s21, 1
      %s341 = scalar_select %p340, %s21, 1
      %s342 = smul.addr %s341, 8
      %s343 = scalar_lea.vmem %s6, %s342
      %p344 = scmp.eq.s32.totalorder %s22, 0
      // Predicated region
      $region45: #{inductive_radial_biasing_force.1} parent=43 // pred_check
        %p345 = pneg %p344
      $region46: #{inductive_radial_biasing_force.1} parent=43 // pred_check_branch
        %347 = sbr.rel (%p345) target = $region48
      $region47: #{inductive_radial_biasing_force.1} parent=43 // pred_region
        %348 = vst [vmem:[#allocation2] sm:$0xff] 0.0
      $region48: #{inductive_radial_biasing_force.1} parent=43 // pred_fallthru
        _
      %v349 = vld [vmem:[%s319] sm:$0xff]
      %v350 = vld [vmem:[%s323] sm:$0xff]
      %v351 = vld [vmem:[%s327] sm:$0xff]
      %v352 = vld [vmem:[%s331] sm:$0xff]
      %v353 = vperm.slane %v349, 0
      %v354 = vsub.f32 %v352, %v353
      %v355 = vmul.f32 %v354, %v354
      %v356 = vld [vmem:[%s335] sm:$0xff]
      %v357 = vperm.slane %v350, 0
      %v358 = vmul.f32 %v357, %v356
      %v359 = vmul.f32 %v355, %v358
      %v360 = vld [vmem:[%s339] sm:$0xff]
      %v361 = vperm.slane %v351, 0
      %v362 = vadd.f32 %v361, %v360
      %v363 = vmul.f32 %v359, 1.442695
      %v364 = vpow.pop %v363
      %v365 = vmul.f32 %v362, %v364
      %v366 = vld [vmem:[#allocation2] sm:$0xff]
      %v367 = vadd.f32 %v366, %v365
      %368 = vst [vmem:[#allocation2] sm:$0xff] %v367
      %v369 = vld [vmem:[%s331] sm:$0xff]
      %v370 = vperm.slane %v349, 1
      %v371 = vsub.f32 %v369, %v370
      %v372 = vmul.f32 %v371, %v371
      %v373 = vld [vmem:[%s335] sm:$0xff]
      %v374 = vperm.slane %v350, 1
      %v375 = vmul.f32 %v374, %v373
      %v376 = vmul.f32 %v372, %v375
      %v377 = vld [vmem:[%s339] sm:$0xff]
      %v378 = vperm.slane %v351, 1
      %v379 = vadd.f32 %v378, %v377
      %v380 = vmul.f32 %v376, 1.442695
      %v381 = vpow.pop %v380
      %v382 = vmul.f32 %v379, %v381
      %v383 = vld [vmem:[#allocation2] sm:$0xff]
      %v384 = vadd.f32 %v383, %v382
      %385 = vst [vmem:[#allocation2] sm:$0xff] %v384
      %v386 = vld [vmem:[%s331] sm:$0xff]
      %v387 = vperm.slane %v349, 2
      %v388 = vsub.f32 %v386, %v387
      %v389 = vmul.f32 %v388, %v388
      %v390 = vld [vmem:[%s335] sm:$0xff]
      %v391 = vperm.slane %v350, 2
      %v392 = vmul.f32 %v391, %v390
      %v393 = vmul.f32 %v389, %v392
      %v394 = vld [vmem:[%s339] sm:$0xff]
      %v395 = vperm.slane %v351, 2
      %v396 = vadd.f32 %v395, %v394
      %v397 = vmul.f32 %v393, 1.442695
      %v398 = vpow.pop %v397
      %v399 = vmul.f32 %v396, %v398
      %v400 = vld [vmem:[#allocation2] sm:$0xff]
      %v401 = vadd.f32 %v400, %v399
      %402 = vst [vmem:[#allocation2] sm:$0xff] %v401
      %v403 = vld [vmem:[%s331] sm:$0xff]
      %v404 = vperm.slane %v349, 3
      %v405 = vsub.f32 %v403, %v404
      %v406 = vmul.f32 %v405, %v405
      %v407 = vld [vmem:[%s335] sm:$0xff]
      %v408 = vperm.slane %v350, 3
      %v409 = vmul.f32 %v408, %v407
      %v410 = vmul.f32 %v406, %v409
      %v411 = vld [vmem:[%s339] sm:$0xff]
      %v412 = vperm.slane %v351, 3
      %v413 = vadd.f32 %v412, %v411
      %v414 = vmul.f32 %v410, 1.442695
      %v415 = vpow.pop %v414
      %v416 = vmul.f32 %v413, %v415
      %v417 = vld [vmem:[#allocation2] sm:$0xff]
      %v418 = vadd.f32 %v417, %v416
      %419 = vst [vmem:[#allocation2] sm:$0xff] %v418
      %v420 = vld [vmem:[%s331] sm:$0xff]
      %v421 = vperm.slane %v349, 4
      %v422 = vsub.f32 %v420, %v421
      %v423 = vmul.f32 %v422, %v422
      %v424 = vld [vmem:[%s335] sm:$0xff]
      %v425 = vperm.slane %v350, 4
      %v426 = vmul.f32 %v425, %v424
      %v427 = vmul.f32 %v423, %v426
      %v428 = vld [vmem:[%s339] sm:$0xff]
      %v429 = vperm.slane %v351, 4
      %v430 = vadd.f32 %v429, %v428
      %v431 = vmul.f32 %v427, 1.442695
      %v432 = vpow.pop %v431
      %v433 = vmul.f32 %v430, %v432
      %v434 = vld [vmem:[#allocation2] sm:$0xff]
      %v435 = vadd.f32 %v434, %v433
      %436 = vst [vmem:[#allocation2] sm:$0xff] %v435
      %v437 = vld [vmem:[%s331] sm:$0xff]
      %v438 = vperm.slane %v349, 5
      %v439 = vsub.f32 %v437, %v438
      %v440 = vmul.f32 %v439, %v439
      %v441 = vld [vmem:[%s335] sm:$0xff]
      %v442 = vperm.slane %v350, 5
      %v443 = vmul.f32 %v442, %v441
      %v444 = vmul.f32 %v440, %v443
      %v445 = vld [vmem:[%s339] sm:$0xff]
      %v446 = vperm.slane %v351, 5
      %v447 = vadd.f32 %v446, %v445
      %v448 = vmul.f32 %v444, 1.442695
      %v449 = vpow.pop %v448
      %v450 = vmul.f32 %v447, %v449
      %v451 = vld [vmem:[#allocation2] sm:$0xff]
      %v452 = vadd.f32 %v451, %v450
      %453 = vst [vmem:[#allocation2] sm:$0xff] %v452
      %v454 = vld [vmem:[%s331] sm:$0xff]
      %v455 = vperm.slane %v349, 6
      %v456 = vsub.f32 %v454, %v455
      %v457 = vmul.f32 %v456, %v456
      %v458 = vld [vmem:[%s335] sm:$0xff]
      %v459 = vperm.slane %v350, 6
      %v460 = vmul.f32 %v459, %v458
      %v461 = vmul.f32 %v457, %v460
      %v462 = vld [vmem:[%s339] sm:$0xff]
      %v463 = vperm.slane %v351, 6
      %v464 = vadd.f32 %v463, %v462
      %v465 = vmul.f32 %v461, 1.442695
      %v466 = vpow.pop %v465
      %v467 = vmul.f32 %v464, %v466
      %v468 = vld [vmem:[#allocation2] sm:$0xff]
      %v469 = vadd.f32 %v468, %v467
      %470 = vst [vmem:[#allocation2] sm:$0xff] %v469
      %v471 = vld [vmem:[%s331] sm:$0xff]
      %v472 = vperm.slane %v349, 7
      %v473 = vsub.f32 %v471, %v472
      %v474 = vmul.f32 %v473, %v473
      %v475 = vld [vmem:[%s335] sm:$0xff]
      %v476 = vperm.slane %v350, 7
      %v477 = vmul.f32 %v476, %v475
      %v478 = vmul.f32 %v474, %v477
      %v479 = vld [vmem:[%s339] sm:$0xff]
      %v480 = vperm.slane %v351, 7
      %v481 = vadd.f32 %v480, %v479
      %v482 = vmul.f32 %v478, 1.442695
      %v483 = vpow.pop %v482
      %v484 = vmul.f32 %v481, %v483
      %v485 = vld [vmem:[#allocation2] sm:$0xff]
      %v486 = vadd.f32 %v485, %v484
      %487 = vst [vmem:[#allocation2] sm:$0xff] %v486
      // Predicated region
      $region49: #{inductive_radial_biasing_force.1} parent=43 // pred_check
        %p488 = pneg %p344
      $region50: #{inductive_radial_biasing_force.1} parent=43 // pred_check_branch
        %490 = sbr.rel (%p488) target = $region52
      $region51: #{inductive_radial_biasing_force.1} parent=43 // pred_region
        %v491 = vld [vmem:[#allocation2] sm:$0xff]
        %492 = vst [vmem:[%s343] sm:$0xff] %v491
      $region52: #{inductive_radial_biasing_force.1} parent=43 // pred_fallthru
        _
      %p493 = scmp.lt.s32.totalorder %s21, 1
      %s494 = scalar_select %p493, %s21, 1
      %s495 = smul.addr %s494, 8
      %s496 = scalar_lea.vmem %s6, %s495
      // Predicated region
      $region53: #{inductive_radial_biasing_force.1} parent=43 // pred_check
        %p497 = pneg %p203
      $region54: #{inductive_radial_biasing_force.1} parent=43 // pred_check_branch
        %499 = sbr.rel (%p497) target = $region56
      $region55: #{inductive_radial_biasing_force.1} parent=43 // pred_region
        _
      $region56: #{inductive_radial_biasing_force.1} parent=43 // pred_fallthru
        _
    $region44: #{inductive_radial_biasing_force.1} parent=5 // pred_fallthru
      _
    %p500 = scmp.le.s32.totalorder 2, %s12
    // Predicated region
    $region57: #{inductive_radial_biasing_force.1} parent=5 // pred_check
      %p501 = pneg %p500
    $region58: #{inductive_radial_biasing_force.1} parent=5 // pred_check_branch
      %503 = sbr.rel (%p501) target = $region60
    $region59: #{inductive_radial_biasing_force.1} parent=5 // pred_region
      %s504 = ssub.s32 %s12, 2
      // Predicated region
      $region61: #{inductive_radial_biasing_force.1} parent=59 // pred_check
        %p505 = pneg %p209
      $region62: #{inductive_radial_biasing_force.1} parent=59 // pred_check_branch
        %507 = sbr.rel (%p505) target = $region64
      $region63: #{inductive_radial_biasing_force.1} parent=59 // pred_region
        %p508 = scmp.lt.s32.totalorder %s23, 1
        %s509 = scalar_select %p508, %s23, 1
        %s510 = smul.addr %s509, 8
        %s511 = scalar_lea.vmem %s6, %s510
      $region64: #{inductive_radial_biasing_force.1} parent=59 // pred_fallthru
        _
    $region60: #{inductive_radial_biasing_force.1} parent=5 // pred_fallthru
      _
  $region6: #{inductive_radial_biasing_force.1} parent=0 // loop_footer
    %s16 = sadd.s32 1, %s12
  $region7: #{inductive_radial_biasing_force.1} parent=0 // loop_footer_branch
    %11 = sbr.rel target = $region3
  $region8: #{inductive_radial_biasing_force.1} parent=0 // loop_exit
    _

</llo_original>
